<compile_context>
chip_gen: v5e
topology: v5e:2x2
jax: 0.10.0
libtpu: 0.0.40
codegen_flags: <defaults>
</compile_context>

<pallas_src>
import jax
import jax.numpy as jnp
from jax import lax
from jax.experimental import pallas as pl
from jax.experimental.pallas import tpu as pltpu

_SUBLANES = 8
_LANES = 128
_MAX_COLS = 8 * _LANES                       # 1024-wide lane-dense slab
_TARGET_BLOCK_BYTES = 8 * 1024 * 1024        # per-input VMEM buffer target
_MIN_SPLIT_BYTES = 1 * 1024 * 1024           # below this: single block
_VMEM_LIMIT_BYTES = 40 * 1024 * 1024         # 2 in x 2 bufs x 8MiB + headroom


def _pick_blocking(rows, cols, itemsize):
    """Choose (block_rows, num_blocks) for a (rows, cols) slab."""
    row_bytes = cols * itemsize
    total_bytes = rows * row_bytes
    if rows <= _SUBLANES or total_bytes <= _MIN_SPLIT_BYTES:
        # Small problem: one full-extent block (any row count is legal).
        return rows, 1
    # Large problem: block_rows is a multiple of 8, capped by the VMEM budget,
    # and at most ~half the rows so v7x's two TensorCores both get work.
    max_rows = max(_SUBLANES,
                   (_TARGET_BLOCK_BYTES // row_bytes) // _SUBLANES * _SUBLANES)
    half = -(-rows // 2)                                  # ceil(rows / 2)
    half = -(-half // _SUBLANES) * _SUBLANES              # round up to x8
    block_rows = min(max_rows, half)
    num_blocks = -(-rows // block_rows)                   # cdiv
    return block_rows, num_blocks


def _build_kernel(total_rows, block_rows, cols, out_cols, num_blocks):
    """Kernel computing the per-block partial sum of (recon - orig)**2."""
    need_mask = (num_blocks * block_rows) != total_rows
    acc_rows = min(_SUBLANES, block_rows)

    def fold_lanes(a):
        # cols -> out_cols via lane-aligned slice adds (128-aligned => free
        # vreg selection + VPU adds; XLU/VPU have plenty of slack here).
        if cols == out_cols:
            return a
        out = a[:, :out_cols]
        for j in range(1, cols // out_cols):
            out = out + a[:, j * out_cols:(j + 1) * out_cols]
        return out

    def kernel(orig_ref, recon_ref, out_ref):
        def sq_diff(start, nrows):
            o = orig_ref[pl.ds(start, nrows), :].astype(jnp.float32)
            r = recon_ref[pl.ds(start, nrows), :].astype(jnp.float32)
            d = r - o
            return d * d

        if block_rows < _SUBLANES:
            # Tiny single-block problem: whole block in one shot.
            o = orig_ref[...].astype(jnp.float32)
            r = recon_ref[...].astype(jnp.float32)
            d = r - o
            acc = d * d
        elif block_rows % _SUBLANES == 0:
            # Main path: stream 8-row chunks; mask rows past the valid extent
            # (only generated when the grid is ragged).
            nchunks = block_rows // _SUBLANES
            base = pl.program_id(0) * block_rows if need_mask else 0

            def body(c, acc):
                i = pl.multiple_of(c * _SUBLANES, _SUBLANES)
                sq = sq_diff(i, _SUBLANES)
                if need_mask:
                    gid = base + i + lax.broadcasted_iota(
                        jnp.int32, (_SUBLANES, cols), 0)
                    sq = jnp.where(gid < total_rows, sq, 0.0)
                return acc + sq

            acc = lax.fori_loop(0, nchunks, body,
                                jnp.zeros((_SUBLANES, cols), jnp.float32),
                                unroll=2)
        else:
            # Single ragged block (block_rows == total_rows, not a multiple of
            # 8, small problem): full 8-row chunks, then one overlapped final
            # chunk that keeps only the not-yet-counted rows.
            nfull = block_rows // _SUBLANES
            rem = block_rows % _SUBLANES

            def body(c, acc):
                i = pl.multiple_of(c * _SUBLANES, _SUBLANES)
                return acc + sq_diff(i, _SUBLANES)

            acc = lax.fori_loop(0, nfull, body,
                                jnp.zeros((_SUBLANES, cols), jnp.float32),
                                unroll=2)
            sq = sq_diff(block_rows - _SUBLANES, _SUBLANES)
            keep = lax.broadcasted_iota(
                jnp.int32, (_SUBLANES, cols), 0) >= (_SUBLANES - rem)
            acc = acc + jnp.where(keep, sq, 0.0)

        out_ref[...] = fold_lanes(acc).reshape(1, acc_rows, out_cols)

    return kernel


def vae_loss(orig, recon, mu=None, log_var=None):
    """orig/recon: (B, ...). mu/log_var accepted for signature parity but
    unused: the reference forward returns only the reconstruction loss.
    NOTE: if the module is ever changed to return recons + kld_weight*KLD,
    this kernel must be extended."""
    del mu, log_var  # KLD term is dead code in the reference forward().
    assert orig.shape == recon.shape
    batch = orig.shape[0]
    n = orig.size
    itemsize = orig.dtype.itemsize

    flat_o = orig.reshape(-1)
    flat_r = recon.reshape(-1)

    # Largest multiple-of-128 lane width that divides n -> free reshape.
    cols = 0
    for c in range(_MAX_COLS, 0, -_LANES):
        if n % c == 0:
            cols = c
            break
    if cols == 0:
        # TODO(synk): rare fallback (n has no multiple-of-128 divisor): a
        # lane-dense free reshape is impossible, so zero-pad the tail (one
        # extra copy; padded zeros contribute 0 to the SSE).
        cols = _MAX_COLS
        pad = (-n) % cols
        flat_o = jnp.pad(flat_o, (0, pad))
        flat_r = jnp.pad(flat_r, (0, pad))
        n_view = n + pad
    else:
        n_view = n
    rows = n_view // cols

    o2 = flat_o.reshape(rows, cols)
    r2 = flat_r.reshape(rows, cols)

    block_rows, num_blocks = _pick_blocking(rows, cols, itemsize)
    acc_rows = min(_SUBLANES, block_rows)
    out_cols = _LANES  # cols is always a multiple of 128 here

    kernel = _build_kernel(rows, block_rows, cols, out_cols, num_blocks)

    partials = pl.pallas_call(
        kernel,
        out_shape=jax.ShapeDtypeStruct((num_blocks, acc_rows, out_cols),
                                       jnp.float32),
        grid_spec=pltpu.PrefetchScalarGridSpec(
            num_scalar_prefetch=0,
            grid=(num_blocks,),
            in_specs=[
                pl.BlockSpec((block_rows, cols), lambda i: (i, 0)),
                pl.BlockSpec((block_rows, cols), lambda i: (i, 0)),
            ],
            out_specs=pl.BlockSpec((1, acc_rows, out_cols),
                                   lambda i: (i, 0, 0)),
        ),
        compiler_params=pltpu.CompilerParams(
            dimension_semantics=("parallel",),
            vmem_limit_bytes=_VMEM_LIMIT_BYTES,
        ),
        cost_estimate=pl.CostEstimate(
            flops=3 * n,
            transcendentals=0,
            bytes_accessed=2 * n * itemsize
            + num_blocks * acc_rows * out_cols * 4,
        ),
    )(o2, r2)

    # Tiny final reduction (num_blocks x 8 x 128 f32) + batch mean in JAX.
    return jnp.sum(partials) / jnp.float32(batch)


if __name__ == "__main__":
    key = jax.random.PRNGKey(0)
    k1, k2, k3, k4 = jax.random.split(key, 4)

    B, C, H, W = 2, 4, 16, 16
    L = 32

    orig = jax.random.normal(k1, (B, C, H, W), dtype=jnp.float32)
    recon = jax.random.normal(k2, (B, C, H, W), dtype=jnp.float32)
    mu = jax.random.normal(k3, (B, L), dtype=jnp.float32)
    log_var = jax.random.normal(k4, (B, L), dtype=jnp.float32) * 0.1

    loss = jax.block_until_ready(jax.jit(vae_loss)(orig, recon, mu, log_var))
    ref = jnp.mean(jnp.sum((recon - orig) ** 2, axis=(1, 2, 3)))
    assert jnp.allclose(loss, ref, rtol=1e-5, atol=1e-5), (loss, ref)

    # Shape with no multiple-of-128 divisor -> exercises the rare pad fallback.
    k5, k6 = jax.random.split(k4)
    o2 = jax.random.normal(k5, (2, 3, 10, 10), dtype=jnp.float32)
    r2 = jax.random.normal(k6, (2, 3, 10, 10), dtype=jnp.float32)
    loss2 = jax.block_until_ready(jax.jit(vae_loss)(o2, r2))
    ref2 = jnp.mean(jnp.sum((r2 - o2) ** 2, axis=(1, 2, 3)))
    assert jnp.allclose(loss2, ref2, rtol=1e-5, atol=1e-5), (loss2, ref2)

    # Larger case exercising the multi-block grid, ragged last block and
    # in-kernel row masking (rows=294, cols=1024, 2 blocks of 152 rows).
    k7, k8 = jax.random.split(k6)
    o3 = jax.random.normal(k7, (2, 3, 224, 224), dtype=jnp.float32)
    r3 = jax.random.normal(k8, (2, 3, 224, 224), dtype=jnp.float32)
    loss3 = jax.block_until_ready(jax.jit(vae_loss)(o3, r3))
    ref3 = jnp.mean(jnp.sum((r3 - o3) ** 2, axis=(1, 2, 3)))
    assert jnp.allclose(loss3, ref3, rtol=1e-4, atol=1e-4), (loss3, ref3)

    print("KERNEL_OK")
</pallas_src>

<mosaic_0001>
module attributes {stable_mosaic.version = 11 : i64} {
  func.func @kernel(%arg0: i32, %arg1: memref<2x1024xf32, #tpu.memory_space<vmem>>, %arg2: memref<2x1024xf32, #tpu.memory_space<vmem>>, %arg3: memref<1x2x128xf32, #tpu.memory_space<vmem>>) attributes {dimension_semantics = [#tpu.dimension_semantics<parallel>], iteration_bounds = array<i64: 1>, scalar_prefetch = 0 : i64, scratch_operands = 0 : i64, tpu.core_type = #tpu.core_type<tc>, window_params = [{transform_indices = @transform_0, window_bounds = array<i64: 2, 1024>}, {transform_indices = @transform_1, window_bounds = array<i64: 2, 1024>}, {transform_indices = @transform_2, window_bounds = array<i64: 1, 2, 128>}]} {
    %c0 = arith.constant 0 : index
    %c0_0 = arith.constant 0 : index
    %0 = vector.load %arg1[%c0, %c0_0] : memref<2x1024xf32, #tpu.memory_space<vmem>>, vector<2x1024xf32>
    %c0_1 = arith.constant 0 : index
    %c0_2 = arith.constant 0 : index
    %1 = vector.load %arg2[%c0_1, %c0_2] : memref<2x1024xf32, #tpu.memory_space<vmem>>, vector<2x1024xf32>
    %2 = arith.subf %1, %0 : vector<2x1024xf32>
    %3 = arith.mulf %2, %2 : vector<2x1024xf32>
    %4 = vector.extract_strided_slice %3 {offsets = [0, 0], sizes = [2, 128], strides = [1, 1]} : vector<2x1024xf32> to vector<2x128xf32>
    %5 = vector.extract_strided_slice %3 {offsets = [0, 128], sizes = [2, 128], strides = [1, 1]} : vector<2x1024xf32> to vector<2x128xf32>
    %6 = arith.addf %4, %5 : vector<2x128xf32>
    %7 = vector.extract_strided_slice %3 {offsets = [0, 256], sizes = [2, 128], strides = [1, 1]} : vector<2x1024xf32> to vector<2x128xf32>
    %8 = arith.addf %6, %7 : vector<2x128xf32>
    %9 = vector.extract_strided_slice %3 {offsets = [0, 384], sizes = [2, 128], strides = [1, 1]} : vector<2x1024xf32> to vector<2x128xf32>
    %10 = arith.addf %8, %9 : vector<2x128xf32>
    %11 = vector.extract_strided_slice %3 {offsets = [0, 512], sizes = [2, 128], strides = [1, 1]} : vector<2x1024xf32> to vector<2x128xf32>
    %12 = arith.addf %10, %11 : vector<2x128xf32>
    %13 = vector.extract_strided_slice %3 {offsets = [0, 640], sizes = [2, 128], strides = [1, 1]} : vector<2x1024xf32> to vector<2x128xf32>
    %14 = arith.addf %12, %13 : vector<2x128xf32>
    %15 = vector.extract_strided_slice %3 {offsets = [0, 768], sizes = [2, 128], strides = [1, 1]} : vector<2x1024xf32> to vector<2x128xf32>
    %16 = arith.addf %14, %15 : vector<2x128xf32>
    %17 = vector.extract_strided_slice %3 {offsets = [0, 896], sizes = [2, 128], strides = [1, 1]} : vector<2x1024xf32> to vector<2x128xf32>
    %18 = arith.addf %16, %17 : vector<2x128xf32>
    %19 = vector.shape_cast %18 : vector<2x128xf32> to vector<1x2x128xf32>
    %c0_3 = arith.constant 0 : index
    %c0_4 = arith.constant 0 : index
    %c0_5 = arith.constant 0 : index
    %20 = vector.load %arg3[%c0_3, %c0_4, %c0_5] : memref<1x2x128xf32, #tpu.memory_space<vmem>>, vector<1x2x128xf32>
    tpu.vector_store %arg3[%c0_3, %c0_4, %c0_5], %19 {strides = array<i32>} : memref<1x2x128xf32, #tpu.memory_space<vmem>>, vector<1x2x128xf32>,
    return
  }
  func.func @transform_0(%arg0: i32) -> (i32, i32) {
    %c0_i32 = arith.constant 0 : i32
    %c0_i32_0 = arith.constant 0 : i32
    return %arg0, %c0_i32 : i32, i32
  }
  func.func @transform_1(%arg0: i32) -> (i32, i32) {
    %c0_i32 = arith.constant 0 : i32
    %c0_i32_0 = arith.constant 0 : i32
    return %arg0, %c0_i32 : i32, i32
  }
  func.func @transform_2(%arg0: i32) -> (i32, i32, i32) {
    %c0_i32 = arith.constant 0 : i32
    %c0_i32_0 = arith.constant 0 : i32
    %c0_i32_1 = arith.constant 0 : i32
    return %arg0, %c0_i32, %c0_i32_0 : i32, i32, i32
  }
}

</mosaic_0001>

<llo_original>
// kernel: vae_loss.1
$region0: #{vae_loss.1}
  #allocation0 [shape = 'u32[]', space=smem, size = 0x4, offset = 0x4, fixed_abs, tag = 'smem constant byte address 0x4 - core index']
  #allocation1 [shape = 'u32[72,128]{1,0:T(1,128)}', space=vmem, size = 0x9000, scoped, tag = 'internal scratch']
  %s0 = inlined_call_operand.vmem [shape: f32[2,1024], index: 0, kind: input, shape index: {}]
  %s1 = inlined_call_operand.vmem [shape: f32[2,1024], index: 1, kind: input, shape index: {}]
  %s2 = inlined_call_operand.vmem [shape: f32[1,2,128], index: 2, kind: output, shape index: {}]
  %s3 = sld [smem:[#allocation0]]
  $region18: #{vae_loss.1} parent=0
    _
  %s5 = ssub.s32 1, %s3
  %s6 = scalar_select 0, %s5, %s3
  // Predicated region
  $region2: #{vae_loss.1} parent=0 // pred_check
    _
  $region3: #{vae_loss.1} parent=0 // pred_check_branch
    %8 = sbr.rel (0) target = $region5
  $region4: #{vae_loss.1} parent=0 // pred_region
    _
  $region5: #{vae_loss.1} parent=0 // pred_fallthru
    _
  // Predicated region
  $region6: #{vae_loss.1} parent=0 // pred_check
    _
  $region7: #{vae_loss.1} parent=0 // pred_check_branch
    %10 = sbr.rel (0) target = $region9
  $region8: #{vae_loss.1} parent=0 // pred_region
    _
  $region9: #{vae_loss.1} parent=0 // pred_fallthru
    _
  %v11 = vld [vmem:[%s0] sm:$0xff]
  %v12 = vld [vmem:[%s0 + $0x8] sm:$0xff]
  %v13 = vld [vmem:[%s1] sm:$0xff]
  %v14 = vld [vmem:[%s1 + $0x8] sm:$0xff]
  %v15 = vsub.f32 %v13, %v11
  %v16 = vsub.f32 %v14, %v12
  %v17 = vmul.f32 %v15, %v15
  %v18 = vmul.f32 %v16, %v16
  %v20 = vrot.slane %v17, 2
  %v22 = vadd.f32 %v17, %v20
  %v23 = vrot.slane %v17, 4
  %v25 = vadd.f32 %v22, %v23
  %v26 = vrot.slane %v17, 6
  %v28 = vadd.f32 %v25, %v26
  %v29 = vadd.f32 %v28, %v18
  %v31 = vrot.slane %v18, 2
  %v33 = vadd.f32 %v29, %v31
  %v34 = vrot.slane %v18, 4
  %v36 = vadd.f32 %v33, %v34
  %v37 = vrot.slane %v18, 6
  %v39 = vadd.f32 %v36, %v37
  %40 = vst [vmem:[%s2] sm:$0x3] %v39
  // Predicated region
  $region10: #{vae_loss.1} parent=0 // pred_check
    _
  $region11: #{vae_loss.1} parent=0 // pred_check_branch
    %42 = sbr.rel (0) target = $region13
  $region12: #{vae_loss.1} parent=0 // pred_region
    _
  $region13: #{vae_loss.1} parent=0 // pred_fallthru
    _
  // Predicated region
  $region14: #{vae_loss.1} parent=0 // pred_check
    _
  $region15: #{vae_loss.1} parent=0 // pred_check_branch
    %44 = sbr.rel (0) target = $region17
  $region16: #{vae_loss.1} parent=0 // pred_region
    _
  $region17: #{vae_loss.1} parent=0 // pred_fallthru
    _

</llo_original>
